<compile_context>
chip_gen: v7x
topology: tpu7x:2x2x1
jax: 0.10.0
libtpu: 0.0.40
codegen_flags: <defaults>
</compile_context>

<pallas_src>
import jax
import jax.numpy as jnp
from jax.experimental import pallas as pl
from jax.experimental.pallas import tpu as pltpu


def primarycaps_kernel(x_ref, wp_ref, bp_ref, wa_ref, ba_ref, pose_ref, act_ref):
    """One grid step: (bn, A, thw) pixels -> pose (bn, P, thw), act (bn, Bc, thw)."""
    wp = wp_ref[...]                      # (P,  A)
    bp = bp_ref[...]                      # (P,  1)  broadcasts over lanes
    wa = wa_ref[...]                      # (Bc, A)
    ba = ba_ref[...]                      # (Bc, 1)
    # Static (unrolled) loop over the small batch tile; each iteration writes
    # its result directly into the output refs -- no fused (P+Bc, thw) temp
    # and no slice-out copy.
    for b in range(x_ref.shape[0]):
        xb = x_ref[b]                     # (A, thw)
        pose = jnp.dot(wp, xb, preferred_element_type=jnp.float32) + bp
        pose_ref[b] = pose.astype(pose_ref.dtype)
        act = jnp.dot(wa, xb, preferred_element_type=jnp.float32) + ba
        act_ref[b] = jax.nn.sigmoid(act).astype(act_ref.dtype)


def _choose_tiles(N, HW, A, C_out, itemsize, *, max_tile_hw=2048,
                  target_step_bytes=512 << 10, vmem_budget=20 << 20):
    """Pick (bn, thw): batch tile and lane tile."""
    # Lane tile: largest multiple of 128 <= min(HW, max_tile_hw); the ragged
    # last block is handled by the cdiv grid.
    if HW <= 128:
        thw = HW                                    # full extent (< 128 is legal)
    else:
        thw = min(max_tile_hw, 128 * (HW // 128))
        while thw > 128 and 2 * (A + C_out) * thw * itemsize > vmem_budget:
            thw -= 128
    per_batch_bytes = (A + C_out) * thw * itemsize  # in + out traffic per batch elem
    # Batch tile: amortize per-step overhead; stay under the VMEM budget
    # (x2 for double buffering).
    bn = pl.cdiv(target_step_bytes, per_batch_bytes)
    bn = max(1, min(bn, N, max(1, vmem_budget // (2 * per_batch_bytes))))
    # Guarantee >= 2 total grid steps so v7x's two TensorCores both get work.
    if pl.cdiv(N, bn) * pl.cdiv(HW, thw) < 2:
        if N >= 2:
            bn = max(1, pl.cdiv(N, 2))
        elif HW > 128:
            thw = max(128, 128 * pl.cdiv(pl.cdiv(HW, 2), 128))
    return bn, thw


def primary_caps(x_nchw, w_pose, b_pose, w_act, b_act, *,
                 out_dtype=None, max_tile_hw=2048):
    """Capsule primary layer (B 1x1 pose convs + B 1x1 activation convs).

    Args:
      x_nchw: (N, A, H, W) input feature map.
      w_pose: (B*16, A) concatenated pose conv weights (out_ch, in_ch).
      b_pose: (B*16,)   concatenated pose conv biases.
      w_act:  (B, A)    concatenated activation conv weights.
      b_act:  (B,)      concatenated activation conv biases.
    Returns:
      poses (N, B*16, H, W), activations (N, B, H, W)  (sigmoid applied).
    """
    N, A, H, W = x_nchw.shape
    P = w_pose.shape[0]
    Bc = w_act.shape[0]
    HW = H * W
    out_dtype = x_nchw.dtype if out_dtype is None else out_dtype
    itemsize = jnp.dtype(x_nchw.dtype).itemsize

    # NCHW view: (N, A, H*W) -- pure reshape, no transpose / extra HBM traffic.
    x3 = x_nchw.reshape(N, A, HW)
    bp2 = b_pose.reshape(P, 1).astype(jnp.float32)
    ba2 = b_act.reshape(Bc, 1).astype(jnp.float32)

    bn, thw = _choose_tiles(N, HW, A, P + Bc, itemsize, max_tile_hw=max_tile_hw)
    grid = (pl.cdiv(N, bn), pl.cdiv(HW, thw))

    # Explicit scoped-VMEM request: double-buffered in/out blocks + f32 matmul
    # results + resident weights, x2 margin, capped at 48 MiB (v7x-safe).
    vmem_need = (2 * bn * (A + P + Bc) * thw * itemsize
                 + bn * (P + Bc) * thw * 4
                 + 2 * (P + Bc) * (A + 1) * itemsize)
    vmem_limit = int(min(max(2 * vmem_need, 32 << 20), 48 << 20))

    cost = pl.CostEstimate(
        flops=2 * N * HW * A * (P + Bc),
        transcendentals=2 * N * HW * Bc,                      # sigmoid ~ exp + recip
        bytes_accessed=itemsize * (N * A * HW                 # input
                                   + N * (P + Bc) * HW        # outputs
                                   + (P + Bc) * (A + 1)),     # weights + biases
    )

    pose_flat, act_flat = pl.pallas_call(
        primarycaps_kernel,
        out_shape=(
            jax.ShapeDtypeStruct((N, P, HW), out_dtype),
            jax.ShapeDtypeStruct((N, Bc, HW), out_dtype),
        ),
        grid_spec=pltpu.PrefetchScalarGridSpec(
            num_scalar_prefetch=0,
            grid=grid,
            in_specs=[
                # x block: bn batch elements, all channels, thw spatial lanes.
                pl.BlockSpec((bn, A, thw), lambda n, j: (n, 0, j)),
                # Weights / biases: resident across the whole grid.
                pl.BlockSpec((P, A), lambda n, j: (0, 0)),
                pl.BlockSpec((P, 1), lambda n, j: (0, 0)),
                pl.BlockSpec((Bc, A), lambda n, j: (0, 0)),
                pl.BlockSpec((Bc, 1), lambda n, j: (0, 0)),
            ],
            out_specs=[
                pl.BlockSpec((bn, P, thw), lambda n, j: (n, 0, j)),
                pl.BlockSpec((bn, Bc, thw), lambda n, j: (n, 0, j)),
            ],
        ),
        compiler_params=pltpu.CompilerParams(
            dimension_semantics=("parallel", "parallel"),
            vmem_limit_bytes=vmem_limit),
        cost_estimate=cost,
    )(x3, w_pose, bp2, w_act, ba2)

    poses = pose_flat.reshape(N, P, H, W)
    activations = act_flat.reshape(N, Bc, H, W)
    return poses, activations


def _reference(x, w_pose, b_pose, w_act, b_act):
    """Pure-JAX reference (matches the PyTorch module semantics)."""
    N, A, H, W = x.shape
    xf = jnp.transpose(x, (0, 2, 3, 1)).reshape(-1, A)
    p = (xf @ w_pose.T + b_pose).reshape(N, H, W, -1).transpose(0, 3, 1, 2)
    a = jax.nn.sigmoid(xf @ w_act.T + b_act).reshape(N, H, W, -1).transpose(0, 3, 1, 2)
    return p, a


if __name__ == "__main__":
    # Small shapes consistent with the module: A input channels, B capsule types.
    N, A, H, W, B = 2, 4, 16, 16, 4

    key = jax.random.PRNGKey(0)
    k1, k2, k3, k4, k5 = jax.random.split(key, 5)

    x = jax.random.normal(k1, (N, A, H, W), dtype=jnp.float32)

    # B pose 1x1 convs (each weight (16, A)) and B activation 1x1 convs (each
    # (1, A)), concatenated along the output-channel dim -- identical to the
    # ModuleList + torch.cat in the PyTorch module.
    w_pose = jax.random.normal(k2, (B * 16, A), dtype=jnp.float32) * 0.1
    b_pose = jax.random.normal(k3, (B * 16,), dtype=jnp.float32) * 0.1
    w_act = jax.random.normal(k4, (B, A), dtype=jnp.float32) * 0.1
    b_act = jax.random.normal(k5, (B,), dtype=jnp.float32) * 0.1

    poses, activations = primary_caps(x, w_pose, b_pose, w_act, b_act)
    jax.block_until_ready((poses, activations))

    p_ref, a_ref = _reference(x, w_pose, b_pose, w_act, b_act)
    assert poses.shape == (N, B * 16, H, W)
    assert activations.shape == (N, B, H, W)
    assert jnp.allclose(poses, p_ref, atol=1e-5), "pose mismatch"
    assert jnp.allclose(activations, a_ref, atol=1e-5), "activation mismatch"

    # Ragged-H*W path (H*W = 196, not a multiple of 128) -- exercises the
    # cdiv grid / masked last lane block instead of the old full-HW fallback.
    H2 = W2 = 14
    x2 = jax.random.normal(jax.random.PRNGKey(1), (N, A, H2, W2), dtype=jnp.float32)
    p2, a2 = primary_caps(x2, w_pose, b_pose, w_act, b_act)
    jax.block_until_ready((p2, a2))
    p2_ref, a2_ref = _reference(x2, w_pose, b_pose, w_act, b_act)
    assert jnp.allclose(p2, p2_ref, atol=1e-5), "ragged pose mismatch"
    assert jnp.allclose(a2, a2_ref, atol=1e-5), "ragged activation mismatch"

    print("KERNEL_OK")
</pallas_src>

<mosaic_0001>
module attributes {stable_mosaic.version = 11 : i64} {
  func.func @primarycaps_kernel(%arg0: i32, %arg1: i32, %arg2: memref<1x4x256xf32, #tpu.memory_space<vmem>>, %arg3: memref<64x4xf32, #tpu.memory_space<vmem>>, %arg4: memref<64x1xf32, #tpu.memory_space<vmem>>, %arg5: memref<4x4xf32, #tpu.memory_space<vmem>>, %arg6: memref<4x1xf32, #tpu.memory_space<vmem>>, %arg7: memref<1x64x256xf32, #tpu.memory_space<vmem>>, %arg8: memref<1x4x256xf32, #tpu.memory_space<vmem>>) attributes {dimension_semantics = [#tpu.dimension_semantics<parallel>, #tpu.dimension_semantics<parallel>], iteration_bounds = array<i64: 2, 1>, scalar_prefetch = 0 : i64, scratch_operands = 0 : i64, tpu.core_type = #tpu.core_type<tc>, window_params = [{transform_indices = @transform_0, window_bounds = array<i64: 1, 4, 256>}, {pipeline_mode = #tpu.pipeline_mode<synchronous>, transform_indices = @transform_1, window_bounds = array<i64: 64, 4>}, {pipeline_mode = #tpu.pipeline_mode<synchronous>, transform_indices = @transform_2, window_bounds = array<i64: 64, 1>}, {pipeline_mode = #tpu.pipeline_mode<synchronous>, transform_indices = @transform_3, window_bounds = array<i64: 4, 4>}, {pipeline_mode = #tpu.pipeline_mode<synchronous>, transform_indices = @transform_4, window_bounds = array<i64: 4, 1>}, {transform_indices = @transform_5, window_bounds = array<i64: 1, 64, 256>}, {transform_indices = @transform_6, window_bounds = array<i64: 1, 4, 256>}]} {
    %c0 = arith.constant 0 : index
    %c0_0 = arith.constant 0 : index
    %0 = vector.load %arg3[%c0, %c0_0] : memref<64x4xf32, #tpu.memory_space<vmem>>, vector<64x4xf32>
    %c0_1 = arith.constant 0 : index
    %c0_2 = arith.constant 0 : index
    %1 = vector.load %arg4[%c0_1, %c0_2] : memref<64x1xf32, #tpu.memory_space<vmem>>, vector<64x1xf32>
    %c0_3 = arith.constant 0 : index
    %c0_4 = arith.constant 0 : index
    %2 = vector.load %arg5[%c0_3, %c0_4] : memref<4x4xf32, #tpu.memory_space<vmem>>, vector<4x4xf32>
    %c0_5 = arith.constant 0 : index
    %c0_6 = arith.constant 0 : index
    %3 = vector.load %arg6[%c0_5, %c0_6] : memref<4x1xf32, #tpu.memory_space<vmem>>, vector<4x1xf32>
    %c0_7 = arith.constant 0 : index
    %c0_8 = arith.constant 0 : index
    %c0_9 = arith.constant 0 : index
    %4 = vector.load %arg2[%c0_7, %c0_8, %c0_9] : memref<1x4x256xf32, #tpu.memory_space<vmem>>, vector<1x4x256xf32>
    %5 = vector.shape_cast %4 : vector<1x4x256xf32> to vector<4x256xf32>
    %cst = arith.constant dense<0.000000e+00> : vector<64x256xf32>
    %6 = tpu.matmul %0, %5, %cst {dimension_numbers = #tpu.dot_dimension_numbers<[1], [0], [0], [1], [0, 0, 1, 1], [], []>} : vector<64x4xf32>, vector<4x256xf32>, vector<64x256xf32> -> vector<64x256xf32>
    %7 = vector.broadcast %1 : vector<64x1xf32> to vector<64x256xf32>
    %8 = arith.addf %6, %7 : vector<64x256xf32>
    %c0_10 = arith.constant 0 : index
    %c0_11 = arith.constant 0 : index
    %c0_12 = arith.constant 0 : index
    %9 = vector.load %arg7[%c0_10, %c0_11, %c0_12] : memref<1x64x256xf32, #tpu.memory_space<vmem>>, vector<1x64x256xf32>
    %10 = vector.shape_cast %9 : vector<1x64x256xf32> to vector<64x256xf32>
    %11 = vector.shape_cast %8 : vector<64x256xf32> to vector<1x64x256xf32>
    tpu.vector_store %arg7[%c0_10, %c0_11, %c0_12], %11 {strides = array<i32>} : memref<1x64x256xf32, #tpu.memory_space<vmem>>, vector<1x64x256xf32>,
    %cst_13 = arith.constant dense<0.000000e+00> : vector<4x256xf32>
    %12 = tpu.matmul %2, %5, %cst_13 {dimension_numbers = #tpu.dot_dimension_numbers<[1], [0], [0], [1], [0, 0, 1, 1], [], []>} : vector<4x4xf32>, vector<4x256xf32>, vector<4x256xf32> -> vector<4x256xf32>
    %13 = vector.broadcast %3 : vector<4x1xf32> to vector<4x256xf32>
    %14 = arith.addf %12, %13 : vector<4x256xf32>
    %15 = arith.negf %14 : vector<4x256xf32>
    %16 = math.exp %15 : vector<4x256xf32>
    %cst_14 = arith.constant 1.000000e+00 : f32
    %17 = vector.broadcast %cst_14 : f32 to vector<4x256xf32>
    %18 = arith.addf %17, %16 : vector<4x256xf32>
    %19 = arith.divf %17, %18 : vector<4x256xf32>
    %c0_15 = arith.constant 0 : index
    %c0_16 = arith.constant 0 : index
    %c0_17 = arith.constant 0 : index
    %20 = vector.load %arg8[%c0_15, %c0_16, %c0_17] : memref<1x4x256xf32, #tpu.memory_space<vmem>>, vector<1x4x256xf32>
    %21 = vector.shape_cast %20 : vector<1x4x256xf32> to vector<4x256xf32>
    %22 = vector.shape_cast %19 : vector<4x256xf32> to vector<1x4x256xf32>
    tpu.vector_store %arg8[%c0_15, %c0_16, %c0_17], %22 {strides = array<i32>} : memref<1x4x256xf32, #tpu.memory_space<vmem>>, vector<1x4x256xf32>,
    return
  }
  func.func @transform_0(%arg0: i32, %arg1: i32) -> (i32, i32, i32) {
    %c0_i32 = arith.constant 0 : i32
    %c0_i32_0 = arith.constant 0 : i32
    return %arg0, %c0_i32, %arg1 : i32, i32, i32
  }
  func.func @transform_1(%arg0: i32, %arg1: i32) -> (i32, i32) {
    %c0_i32 = arith.constant 0 : i32
    %c0_i32_0 = arith.constant 0 : i32
    %c0_i32_1 = arith.constant 0 : i32
    return %c0_i32, %c0_i32_0 : i32, i32
  }
  func.func @transform_2(%arg0: i32, %arg1: i32) -> (i32, i32) {
    %c0_i32 = arith.constant 0 : i32
    %c0_i32_0 = arith.constant 0 : i32
    %c0_i32_1 = arith.constant 0 : i32
    return %c0_i32, %c0_i32_0 : i32, i32
  }
  func.func @transform_3(%arg0: i32, %arg1: i32) -> (i32, i32) {
    %c0_i32 = arith.constant 0 : i32
    %c0_i32_0 = arith.constant 0 : i32
    %c0_i32_1 = arith.constant 0 : i32
    return %c0_i32, %c0_i32_0 : i32, i32
  }
  func.func @transform_4(%arg0: i32, %arg1: i32) -> (i32, i32) {
    %c0_i32 = arith.constant 0 : i32
    %c0_i32_0 = arith.constant 0 : i32
    %c0_i32_1 = arith.constant 0 : i32
    return %c0_i32, %c0_i32_0 : i32, i32
  }
  func.func @transform_5(%arg0: i32, %arg1: i32) -> (i32, i32, i32) {
    %c0_i32 = arith.constant 0 : i32
    %c0_i32_0 = arith.constant 0 : i32
    return %arg0, %c0_i32, %arg1 : i32, i32, i32
  }
  func.func @transform_6(%arg0: i32, %arg1: i32) -> (i32, i32, i32) {
    %c0_i32 = arith.constant 0 : i32
    %c0_i32_0 = arith.constant 0 : i32
    return %arg0, %c0_i32, %arg1 : i32, i32, i32
  }
}

</mosaic_0001>

<llo_original>
// kernel: tpu_custom_call.1
$region0: #{tpu_custom_call.1}
  #allocation0 [shape = 'u32[]', space=smem, size = 0x4, offset = 0x4, fixed_abs, tag = 'smem constant byte address 0x4 - core index']
  #allocation1 [shape = 'u32[144,128]{1,0:T(1,128)}', space=vmem, size = 0x12000, scoped, tag = 'internal scratch']
  %s0 = inlined_call_operand.vmem [shape: f32[2,4,256], index: 0, kind: input, shape index: {}]
  %s1 = inlined_call_operand.vmem [shape: f32[64,4], index: 1, kind: input, shape index: {}]
  %s2 = inlined_call_operand.vmem [shape: f32[64,1], index: 2, kind: input, shape index: {}]
  %s3 = inlined_call_operand.vmem [shape: f32[4,4], index: 3, kind: input, shape index: {}]
  %s4 = inlined_call_operand.vmem [shape: f32[4,1], index: 4, kind: input, shape index: {}]
  %s5 = inlined_call_operand.hbm [shape: f32[2,64,256], index: 5, kind: output, shape index: {0}]
  %s6 = inlined_call_operand.hbm [shape: f32[2,4,256], index: 6, kind: output, shape index: {1}]
  %7 = xla_tuple %s5, %s6
  %s8 = sld [smem:[#allocation0]]
  $region61: #{tpu_custom_call.1} parent=0
    _
  %s10 = ssub.s32 1, %s8
  %s11 = scalar_select 0, %s10, %s8
  $region1: #{tpu_custom_call.1} parent=0
    #allocation2 [shape = 'u8[131072]{0}', space=vmem, size = 0x20000, scoped, tag = 'output window, operand 0']
    #allocation3 [shape = 's32[2]{0}', space=sflag, size = 0x8, scoped, tag = 'scoped memory for tpu_custom_call.1']
    #allocation4 [shape = 'u8[8192]{0}', space=vmem, size = 0x2000, scoped, tag = 'output window, operand 1']
    #allocation5 [shape = 's32[2]{0}', space=sflag, size = 0x8, scoped, tag = 'scoped memory for tpu_custom_call.1']
    %12 = vsyncpa [#allocation3], 0
    %s13 = scalar_lea.sflag [#allocation3], 1
    %14 = vsyncpa %s13, 0
    %15 = vsyncpa [#allocation5], 0
    %s16 = scalar_lea.sflag [#allocation5], 1
    %17 = vsyncpa %s16, 0
    loop: start=0, step=1, limit=4
    $region2: #{tpu_custom_call.1} parent=1 // loop_pre_header
      _
    $region3: #{tpu_custom_call.1} parent=1 // loop_header
      %s19 = sphi 0, %s23
      %p20 = scmp.ge.s32.totalorder %s19, 4
      %s26 = sphi 0, %s38
      %s27 = sphi 0, %s34
      %s28 = sphi 0, %s26
      %s29 = sphi 0, %s27
      %s30 = sphi 0, %s28
      %s31 = sphi 0, %s29
      %s43 = sphi 0, %s45
      %s46 = sphi 0, %s43
      %s47 = sphi 0, %s46
      %s63 = sphi 0, %s47
      %s67 = sphi 0, %s67
      %s69 = sphi 0, %s67
      %s70 = sphi 0, %s69
      %s84 = sphi 0, %s70
      %s88 = sphi 0, %s88
      %s90 = sphi 0, %s88
      %s91 = sphi 0, %s90
      %s105 = sphi 0, %s91
      %s109 = sphi 0, %s109
      %s111 = sphi 0, %s109
      %s112 = sphi 0, %s111
      %s126 = sphi 0, %s112
      %s130 = sphi 0, %s130
      %s132 = sphi 0, %s130
      %s133 = sphi 0, %s132
      %s147 = sphi 0, %s133
      %s155 = sphi 0, %s157
      %s158 = sphi 0, %s155
      %s159 = sphi 0, %s158
      %s175 = sphi 0, %s159
      %s183 = sphi 0, %s185
      %s186 = sphi 0, %s183
      %s187 = sphi 0, %s186
      %s203 = sphi 0, %s187
    $region4: #{tpu_custom_call.1} parent=1 // loop_header_branch
      %22 = sbr.rel (%p20) target = $region8
    $region5: #{tpu_custom_call.1} parent=1 // loop_body
      %s24 = ssub.s32 %s19, 1
      %s25 = ssub.s32 %s19, 2
      %s32 = sadd.s32 1, %s27
      %p33 = scmp.ge.s32.totalorder %s32, 1
      %s34 = scalar_select %p33, 0, %s32
      %s35 = sadd.s32 1, %s26
      %s36 = scalar_select %p33, %s35, %s26
      %p37 = scmp.ge.s32.totalorder %s36, 2
      %s38 = scalar_select %p37, 0, %s36
      %s39 = ssub.s32 %s26, %s38
      %s40 = ssub.s32 %s27, %s34
      %s41 = sor.u32 %s39, %s40
      %p42 = scmp.eq.s32.totalorder %s41, 0
      %s44 = sadd.s32 %s43, 1
      %s45 = scalar_select %p42, %s43, %s44
      %p48 = pneg %p42
      %p49 = scmp.eq.s32.totalorder %s19, 1
      %p50 = por %p48, %p49
      %p51 = scmp.ne.s32.totalorder %s43, %s46
      %p52 = scmp.eq.s32.totalorder %s19, 0
      %p53 = por %p51, %p52
      %p54 = scmp.ne.s32.totalorder %s43, %s46
      %p55 = scmp.eq.s32.totalorder %s24, 1
      %p56 = por %p54, %p55
      %p57 = scmp.ne.s32.totalorder %s46, %s47
      %p58 = scmp.eq.s32.totalorder %s24, 0
      %p59 = por %p57, %p58
      %p60 = scmp.ne.s32.totalorder %s46, %s47
      %p61 = scmp.eq.s32.totalorder %s25, 1
      %p62 = por %p60, %p61
      %p64 = scmp.ne.s32.totalorder %s47, %s63
      %p65 = scmp.eq.s32.totalorder %s25, 0
      %p66 = por %p64, %p65
      %s68 = sadd.s32 %s67, 1
      %p71 = scmp.eq.s32.totalorder %s19, 1
      %p72 = scmp.ne.s32.totalorder %s67, %s69
      %p73 = scmp.eq.s32.totalorder %s19, 0
      %p74 = por %p72, %p73
      %p75 = scmp.ne.s32.totalorder %s67, %s69
      %p76 = scmp.eq.s32.totalorder %s24, 1
      %p77 = por %p75, %p76
      %p78 = scmp.ne.s32.totalorder %s69, %s70
      %p79 = scmp.eq.s32.totalorder %s24, 0
      %p80 = por %p78, %p79
      %p81 = scmp.ne.s32.totalorder %s69, %s70
      %p82 = scmp.eq.s32.totalorder %s25, 1
      %p83 = por %p81, %p82
      %p85 = scmp.ne.s32.totalorder %s70, %s84
      %p86 = scmp.eq.s32.totalorder %s25, 0
      %p87 = por %p85, %p86
      %s89 = sadd.s32 %s88, 1
      %p92 = scmp.eq.s32.totalorder %s19, 1
      %p93 = scmp.ne.s32.totalorder %s88, %s90
      %p94 = scmp.eq.s32.totalorder %s19, 0
      %p95 = por %p93, %p94
      %p96 = scmp.ne.s32.totalorder %s88, %s90
      %p97 = scmp.eq.s32.totalorder %s24, 1
      %p98 = por %p96, %p97
      %p99 = scmp.ne.s32.totalorder %s90, %s91
      %p100 = scmp.eq.s32.totalorder %s24, 0
      %p101 = por %p99, %p100
      %p102 = scmp.ne.s32.totalorder %s90, %s91
      %p103 = scmp.eq.s32.totalorder %s25, 1
      %p104 = por %p102, %p103
      %p106 = scmp.ne.s32.totalorder %s91, %s105
      %p107 = scmp.eq.s32.totalorder %s25, 0
      %p108 = por %p106, %p107
      %s110 = sadd.s32 %s109, 1
      %p113 = scmp.eq.s32.totalorder %s19, 1
      %p114 = scmp.ne.s32.totalorder %s109, %s111
      %p115 = scmp.eq.s32.totalorder %s19, 0
      %p116 = por %p114, %p115
      %p117 = scmp.ne.s32.totalorder %s109, %s111
      %p118 = scmp.eq.s32.totalorder %s24, 1
      %p119 = por %p117, %p118
      %p120 = scmp.ne.s32.totalorder %s111, %s112
      %p121 = scmp.eq.s32.totalorder %s24, 0
      %p122 = por %p120, %p121
      %p123 = scmp.ne.s32.totalorder %s111, %s112
      %p124 = scmp.eq.s32.totalorder %s25, 1
      %p125 = por %p123, %p124
      %p127 = scmp.ne.s32.totalorder %s112, %s126
      %p128 = scmp.eq.s32.totalorder %s25, 0
      %p129 = por %p127, %p128
      %s131 = sadd.s32 %s130, 1
      %p134 = scmp.eq.s32.totalorder %s19, 1
      %p135 = scmp.ne.s32.totalorder %s130, %s132
      %p136 = scmp.eq.s32.totalorder %s19, 0
      %p137 = por %p135, %p136
      %p138 = scmp.ne.s32.totalorder %s130, %s132
      %p139 = scmp.eq.s32.totalorder %s24, 1
      %p140 = por %p138, %p139
      %p141 = scmp.ne.s32.totalorder %s132, %s133
      %p142 = scmp.eq.s32.totalorder %s24, 0
      %p143 = por %p141, %p142
      %p144 = scmp.ne.s32.totalorder %s132, %s133
      %p145 = scmp.eq.s32.totalorder %s25, 1
      %p146 = por %p144, %p145
      %p148 = scmp.ne.s32.totalorder %s133, %s147
      %p149 = scmp.eq.s32.totalorder %s25, 0
      %p150 = por %p148, %p149
      %s151 = ssub.s32 %s26, %s38
      %s152 = ssub.s32 %s27, %s34
      %s153 = sor.u32 %s151, %s152
      %p154 = scmp.eq.s32.totalorder %s153, 0
      %s156 = sadd.s32 %s155, 1
      %s157 = scalar_select %p154, %s155, %s156
      %p160 = pneg %p154
      %p161 = scmp.eq.s32.totalorder %s19, 1
      %p162 = por %p160, %p161
      %p163 = scmp.ne.s32.totalorder %s155, %s158
      %p164 = scmp.eq.s32.totalorder %s19, 0
      %p165 = por %p163, %p164
      %p166 = scmp.ne.s32.totalorder %s155, %s158
      %p167 = scmp.eq.s32.totalorder %s24, 1
      %p168 = por %p166, %p167
      %p169 = scmp.ne.s32.totalorder %s158, %s159
      %p170 = scmp.eq.s32.totalorder %s24, 0
      %p171 = por %p169, %p170
      %p172 = scmp.ne.s32.totalorder %s158, %s159
      %p173 = scmp.eq.s32.totalorder %s25, 1
      %p174 = por %p172, %p173
      %p176 = scmp.ne.s32.totalorder %s159, %s175
      %p177 = scmp.eq.s32.totalorder %s25, 0
      %p178 = por %p176, %p177
      %s179 = ssub.s32 %s26, %s38
      %s180 = ssub.s32 %s27, %s34
      %s181 = sor.u32 %s179, %s180
      %p182 = scmp.eq.s32.totalorder %s181, 0
      %s184 = sadd.s32 %s183, 1
      %s185 = scalar_select %p182, %s183, %s184
      %p188 = pneg %p182
      %p189 = scmp.eq.s32.totalorder %s19, 1
      %p190 = por %p188, %p189
      %p191 = scmp.ne.s32.totalorder %s183, %s186
      %p192 = scmp.eq.s32.totalorder %s19, 0
      %p193 = por %p191, %p192
      %p194 = scmp.ne.s32.totalorder %s183, %s186
      %p195 = scmp.eq.s32.totalorder %s24, 1
      %p196 = por %p194, %p195
      %p197 = scmp.ne.s32.totalorder %s186, %s187
      %p198 = scmp.eq.s32.totalorder %s24, 0
      %p199 = por %p197, %p198
      %p200 = scmp.ne.s32.totalorder %s186, %s187
      %p201 = scmp.eq.s32.totalorder %s25, 1
      %p202 = por %p200, %p201
      %p204 = scmp.ne.s32.totalorder %s187, %s203
      %p205 = scmp.eq.s32.totalorder %s25, 0
      %p206 = por %p204, %p205
      %p207 = scmp.le.s32.totalorder 1, %s19
      %p208 = scmp.lt.s32.totalorder %s19, 3
      %p209 = pnand %p207, %p208
      %p210 = pneg %p209
      // Predicated region
      $region9: #{tpu_custom_call.1} parent=5 // pred_check
        _
      $region10: #{tpu_custom_call.1} parent=5 // pred_check_branch
        %212 = sbr.rel (%p209) target = $region12
      $region11: #{tpu_custom_call.1} parent=5 // pred_region
        %s213 = ssub.s32 %s19, 1
        // Predicated region
        $region13: #{tpu_custom_call.1} parent=11 // pred_check
          %p214 = pneg %p80
        $region14: #{tpu_custom_call.1} parent=11 // pred_check_branch
          %216 = sbr.rel (%p214) target = $region16
        $region15: #{tpu_custom_call.1} parent=11 // pred_region
          _
        $region16: #{tpu_custom_call.1} parent=11 // pred_fallthru
          _
        // Predicated region
        $region17: #{tpu_custom_call.1} parent=11 // pred_check
          %p217 = pneg %p101
        $region18: #{tpu_custom_call.1} parent=11 // pred_check_branch
          %219 = sbr.rel (%p217) target = $region20
        $region19: #{tpu_custom_call.1} parent=11 // pred_region
          _
        $region20: #{tpu_custom_call.1} parent=11 // pred_fallthru
          _
        // Predicated region
        $region21: #{tpu_custom_call.1} parent=11 // pred_check
          %p220 = pneg %p122
        $region22: #{tpu_custom_call.1} parent=11 // pred_check_branch
          %222 = sbr.rel (%p220) target = $region24
        $region23: #{tpu_custom_call.1} parent=11 // pred_region
          _
        $region24: #{tpu_custom_call.1} parent=11 // pred_fallthru
          _
        // Predicated region
        $region25: #{tpu_custom_call.1} parent=11 // pred_check
          %p223 = pneg %p143
        $region26: #{tpu_custom_call.1} parent=11 // pred_check_branch
          %225 = sbr.rel (%p223) target = $region28
        $region27: #{tpu_custom_call.1} parent=11 // pred_region
          _
        $region28: #{tpu_custom_call.1} parent=11 // pred_fallthru
          _
      $region12: #{tpu_custom_call.1} parent=5 // pred_fallthru
        _
      %p226 = scmp.lt.s32.totalorder %s19, 2
      // Predicated region
      $region29: #{tpu_custom_call.1} parent=5 // pred_check
        %p227 = pneg %p226
      $region30: #{tpu_custom_call.1} parent=5 // pred_check_branch
        %229 = sbr.rel (%p227) target = $region32
      $region31: #{tpu_custom_call.1} parent=5 // pred_region
        // Predicated region
        $region33: #{tpu_custom_call.1} parent=31 // pred_check
          %p230 = pneg %p53
        $region34: #{tpu_custom_call.1} parent=31 // pred_check_branch
          %232 = sbr.rel (%p230) target = $region36
        $region35: #{tpu_custom_call.1} parent=31 // pred_region
          %s233 = smul.u32 2, %s27
          %p234 = scmp.lt.s32.totalorder %s26, 1
          %s235 = scalar_select %p234, %s26, 1
          %p236 = scmp.lt.s32.totalorder %s233, 1
          %s237 = scalar_select %p236, %s233, 1
          %s238 = smul.addr %s235, 2
          %s239 = sadd.s32 %s237, %s238
          %s240 = smul.addr %s239, 4
          %s241 = scalar_lea.vmem %s0, %s240
          %s242 = smul.u32 2, %s27
        $region36: #{tpu_custom_call.1} parent=31 // pred_fallthru
          _
      $region32: #{tpu_custom_call.1} parent=5 // pred_fallthru
        _
      %p243 = scmp.le.s32.totalorder 1, %s19
      %p244 = scmp.lt.s32.totalorder %s19, 3
      %p245 = pnand %p243, %p244
      %p246 = pneg %p245
      // Predicated region
      $region37: #{tpu_custom_call.1} parent=5 // pred_check
        _
      $region38: #{tpu_custom_call.1} parent=5 // pred_check_branch
        %248 = sbr.rel (%p245) target = $region40
      $region39: #{tpu_custom_call.1} parent=5 // pred_region
        %s249 = ssub.s32 %s19, 1
        %s250 = smul.u32 2, %s29
        %p251 = scmp.lt.s32.totalorder %s28, 1
        %s252 = scalar_select %p251, %s28, 1
        %p253 = scmp.lt.s32.totalorder %s250, 1
        %s254 = scalar_select %p253, %s250, 1
        %s255 = smul.addr %s252, 2
        %s256 = sadd.s32 %s254, %s255
        %s257 = smul.addr %s256, 4
        %s258 = scalar_lea.vmem %s0, %s257
        %p259 = pneg %p59
        %p260 = pneg %p56
        %p261 = pneg %p80
        %p262 = pneg %p77
        %p263 = pneg %p101
        %p264 = pneg %p98
        %p265 = pneg %p122
        %p266 = pneg %p119
        %p267 = pneg %p143
        %p268 = pneg %p140
        %p269 = pneg %p171
        %p270 = pneg %p168
        %s271 = sand.u32 %s158, 1
        %s272 = scalar_lea.sflag [#allocation3], %s271
        %s273 = sand.u32 %s158, 1
        %s274 = smul.addr %s273, 128
        %s275 = scalar_lea.vmem [#allocation2], %s274
        %p276 = pneg %p199
        %p277 = pneg %p196
        %s278 = sand.u32 %s186, 1
        %s279 = scalar_lea.sflag [#allocation5], %s278
        %s280 = sand.u32 %s186, 1
        %s281 = smul.addr %s280, 8
        %s282 = scalar_lea.vmem [#allocation4], %s281
        %s283 = smul.u32 2, %s29
        %p284 = scmp.lt.s32.totalorder %s28, 1
        %s285 = scalar_select %p284, %s28, 1
        %p286 = scmp.lt.s32.totalorder %s283, 1
        %s287 = scalar_select %p286, %s283, 1
        %s288 = smul.addr %s285, 2
        %s289 = sadd.s32 %s287, %s288
        %s290 = smul.addr %s289, 4
        %s291 = scalar_lea.vmem %s0, %s290
        %s292 = smul.u32 2, %s29
        %s293 = smul.u32 2, %s29
        %s294 = smul.u32 2, %s29
        %v295 = vld [vmem:[%s1] sm:$0xff]
        %v296 = vld [vmem:[%s1 + $0x8] sm:$0xff]
        %v297 = vld [vmem:[%s1 + $0x10] sm:$0xff]
        %v298 = vld [vmem:[%s1 + $0x18] sm:$0xff]
        %v299 = vld [vmem:[%s1 + $0x20] sm:$0xff]
        %v300 = vld [vmem:[%s1 + $0x28] sm:$0xff]
        %v301 = vld [vmem:[%s1 + $0x30] sm:$0xff]
        %v302 = vld [vmem:[%s1 + $0x38] sm:$0xff]
        %v303 = vld [vmem:[%s2] sm:$0xff]
        %v304 = vld [vmem:[%s2 + $0x8] sm:$0xff]
        %v305 = vld [vmem:[%s2 + $0x10] sm:$0xff]
        %v306 = vld [vmem:[%s2 + $0x18] sm:$0xff]
        %v307 = vld [vmem:[%s2 + $0x20] sm:$0xff]
        %v308 = vld [vmem:[%s2 + $0x28] sm:$0xff]
        %v309 = vld [vmem:[%s2 + $0x30] sm:$0xff]
        %v310 = vld [vmem:[%s2 + $0x38] sm:$0xff]
        %v311 = vld [vmem:[%s3] sm:$0xf]
        %v312 = vld [vmem:[%s4] sm:$0xf]
        %v313 = vld [vmem:[%s291] sm:$0xff]
        %315 = vset.pattern.permute.xlu0 0
        %316 = vperm.xlu0 %315, %v303
        %v317 = vpop.permute.xlu0 %316
        %320 = vset.pattern.permute.xlu0 0
        %321 = vperm.xlu0 %320, %v304
        %v322 = vpop.permute.xlu0 %321
        %325 = vset.pattern.permute.xlu0 0
        %326 = vperm.xlu0 %325, %v305
        %v327 = vpop.permute.xlu0 %326
        %330 = vset.pattern.permute.xlu0 0
        %331 = vperm.xlu0 %330, %v306
        %v332 = vpop.permute.xlu0 %331
        %335 = vset.pattern.permute.xlu0 0
        %336 = vperm.xlu0 %335, %v307
        %v337 = vpop.permute.xlu0 %336
        %340 = vset.pattern.permute.xlu0 0
        %341 = vperm.xlu0 %340, %v308
        %v342 = vpop.permute.xlu0 %341
        %345 = vset.pattern.permute.xlu0 0
        %346 = vperm.xlu0 %345, %v309
        %v347 = vpop.permute.xlu0 %346
        %350 = vset.pattern.permute.xlu0 0
        %351 = vperm.xlu0 %350, %v310
        %v352 = vpop.permute.xlu0 %351
        %v355 = vcombine.high %v313, %v313
        %vm356 = vcmask 31744
        %v358 = vsel %vm356, %v295, 0
        %v361 = vsel %vm356, %v296, 0
        %v364 = vsel %vm356, %v297, 0
        %v367 = vsel %vm356, %v298, 0
        %v370 = vsel %vm356, %v299, 0
        %v373 = vsel %vm356, %v300, 0
        %v376 = vsel %vm356, %v301, 0
        %v379 = vsel %vm356, %v302, 0
        %vm381 = vcmask 1043456
        %v382 = vsel %vm381, %v313, 0
        %v384 = vsel %vm381, %v355, 0
        %386 = vmatprep.subr.mxu0 %v384
        %387 = vmatpush1.msra.mxu0 %v382
        %388 = vmatprep.subr.mxu0 0.0
        %389 = vmatpush1.msra.mxu0 0.0
        %390 = vmatprep.subr.mxu0 0.0
        %391 = vmatpush1.msra.mxu0 0.0
        %392 = vmatprep.subr.mxu0 0.0
        %393 = vmatpush1.msra.mxu0 0.0
        %394 = vmatprep.subr.mxu0 0.0
        %395 = vmatpush1.msra.mxu0 0.0
        %396 = vmatprep.subr.mxu0 0.0
        %397 = vmatpush1.msra.mxu0 0.0
        %398 = vmatprep.subr.mxu0 0.0
        %399 = vmatpush1.msra.mxu0 0.0
        %400 = vmatprep.subr.mxu0 0.0
        %401 = vmatpush1.msra.mxu0 0.0
        %402 = vmatprep.subr.mxu0 0.0
        %403 = vmatpush1.msra.mxu0 0.0
        %404 = vmatprep.subr.mxu0 0.0
        %405 = vmatpush1.msra.mxu0 0.0
        %406 = vmatprep.subr.mxu0 0.0
        %407 = vmatpush1.msra.mxu0 0.0
        %408 = vmatprep.subr.mxu0 0.0
        %409 = vmatpush1.msra.mxu0 0.0
        %410 = vmatprep.subr.mxu0 0.0
        %411 = vmatpush1.msra.mxu0 0.0
        %412 = vmatprep.subr.mxu0 0.0
        %413 = vmatpush1.msra.mxu0 0.0
        %414 = vmatprep.subr.mxu0 0.0
        %415 = vmatpush1.msra.mxu0 0.0
        %416 = vmatprep.subr.mxu0 0.0
        %417 = vmatpush1.msra.mxu0 0.0
        %418 = vmatprep.subr.mxu0 0.0
        %419 = vmatpush1.msra.mxu0 0.0
        %420 = vmatprep.subr.mxu0 0.0
        %421 = vmatpush1.msra.mxu0 0.0
        %422 = vmatprep.subr.mxu0 0.0
        %423 = vmatpush1.msra.mxu0 0.0
        %424 = vmatprep.subr.mxu0 0.0
        %425 = vmatpush1.msra.mxu0 0.0
        %426 = vmatprep.subr.mxu0 0.0
        %427 = vmatpush1.msra.mxu0 0.0
        %428 = vmatprep.subr.mxu0 0.0
        %429 = vmatpush1.msra.mxu0 0.0
        %430 = vmatprep.subr.mxu0 0.0
        %431 = vmatpush1.msra.mxu0 0.0
        %432 = vmatprep.subr.mxu0 0.0
        %433 = vmatpush1.msra.mxu0 0.0
        %434 = vmatprep.subr.mxu0 0.0
        %435 = vmatpush1.msra.mxu0 0.0
        %436 = vmatprep.subr.mxu0 0.0
        %437 = vmatpush1.msra.mxu0 0.0
        %438 = vmatprep.subr.mxu0 0.0
        %439 = vmatpush1.msra.mxu0 0.0
        %440 = vmatprep.subr.mxu0 0.0
        %441 = vmatpush1.msra.mxu0 0.0
        %442 = vmatprep.subr.mxu0 0.0
        %443 = vmatpush1.msra.mxu0 0.0
        %444 = vmatprep.subr.mxu0 0.0
        %445 = vmatpush1.msra.mxu0 0.0
        %446 = vmatprep.subr.mxu0 0.0
        %447 = vmatpush1.msra.mxu0 0.0
        %448 = vmatprep.subr.mxu0 0.0
        %449 = vmatpush1.msra.mxu0 0.0
        %450 = vmatprep.mubr.f32.mxu0 0.0
        %451 = vmatmul.mubr.f32.gmra.mrb[0].mxu0 %v358
        %v452 = vpop.f32.mrb[0].mxu0
        %v453 = vadd.f32 %v317, %v452
        %v454 = vpop.f32.mrb[0].mxu0
        %v455 = vadd.f32 %v317, %v454
        %456 = vmatprep.mubr.f32.mxu0 0.0
        %457 = vmatmul.mubr.f32.gmra.mrb[0].mxu0 %v361
        %v458 = vpop.f32.mrb[0].mxu0
        %v459 = vadd.f32 %v322, %v458
        %v460 = vpop.f32.mrb[0].mxu0
        %v461 = vadd.f32 %v322, %v460
        %462 = vmatprep.mubr.f32.mxu0 0.0
        %463 = vmatmul.mubr.f32.gmra.mrb[0].mxu0 %v364
        %v464 = vpop.f32.mrb[0].mxu0
        %v465 = vadd.f32 %v327, %v464
        %v466 = vpop.f32.mrb[0].mxu0
        %v467 = vadd.f32 %v327, %v466
        %468 = vmatprep.mubr.f32.mxu0 0.0
        %469 = vmatmul.mubr.f32.gmra.mrb[0].mxu0 %v367
        %v470 = vpop.f32.mrb[0].mxu0
        %v471 = vadd.f32 %v332, %v470
        %v472 = vpop.f32.mrb[0].mxu0
        %v473 = vadd.f32 %v332, %v472
        %474 = vmatprep.mubr.f32.mxu0 0.0
        %475 = vmatmul.mubr.f32.gmra.mrb[0].mxu0 %v370
        %v476 = vpop.f32.mrb[0].mxu0
        %v477 = vadd.f32 %v337, %v476
        %v478 = vpop.f32.mrb[0].mxu0
        %v479 = vadd.f32 %v337, %v478
        %480 = vmatprep.mubr.f32.mxu0 0.0
        %481 = vmatmul.mubr.f32.gmra.mrb[0].mxu0 %v373
        %v482 = vpop.f32.mrb[0].mxu0
        %v483 = vadd.f32 %v342, %v482
        %v484 = vpop.f32.mrb[0].mxu0
        %v485 = vadd.f32 %v342, %v484
        %486 = vmatprep.mubr.f32.mxu0 0.0
        %487 = vmatmul.mubr.f32.gmra.mrb[0].mxu0 %v376
        %v488 = vpop.f32.mrb[0].mxu0
        %v489 = vadd.f32 %v347, %v488
        %v490 = vpop.f32.mrb[0].mxu0
        %v491 = vadd.f32 %v347, %v490
        %492 = vmatprep.mubr.f32.mxu0 0.0
        %493 = vmatmul.mubr.f32.gmra.mrb[0].mxu0 %v379
        %v494 = vpop.f32.mrb[0].mxu0
        %v495 = vadd.f32 %v352, %v494
        %v496 = vpop.f32.mrb[0].mxu0
        %v497 = vadd.f32 %v352, %v496
        %498 = vdwg.mxu0
        %499 = vst [vmem:[%s275] sm:$0xff] %v453
        %500 = vst [vmem:[%s275 + $0x8] sm:$0xff] %v455
        %501 = vst [vmem:[%s275 + $0x10] sm:$0xff] %v459
        %502 = vst [vmem:[%s275 + $0x18] sm:$0xff] %v461
        %503 = vst [vmem:[%s275 + $0x20] sm:$0xff] %v465
        %504 = vst [vmem:[%s275 + $0x28] sm:$0xff] %v467
        %505 = vst [vmem:[%s275 + $0x30] sm:$0xff] %v471
        %506 = vst [vmem:[%s275 + $0x38] sm:$0xff] %v473
        %507 = vst [vmem:[%s275 + $0x40] sm:$0xff] %v477
        %508 = vst [vmem:[%s275 + $0x48] sm:$0xff] %v479
        %509 = vst [vmem:[%s275 + $0x50] sm:$0xff] %v483
        %510 = vst [vmem:[%s275 + $0x58] sm:$0xff] %v485
        %511 = vst [vmem:[%s275 + $0x60] sm:$0xff] %v489
        %512 = vst [vmem:[%s275 + $0x68] sm:$0xff] %v491
        %513 = vst [vmem:[%s275 + $0x70] sm:$0xff] %v495
        %514 = vst [vmem:[%s275 + $0x78] sm:$0xff] %v497
        %516 = vset.pattern.permute.xlu0 0
        %517 = vperm.xlu0 %516, %v312
        %v518 = vpop.permute.xlu0 %517
        %v521 = vsel %vm356, %v311, 0
        %523 = vmatprep.subr.mxu0 %v384
        %524 = vmatpush1.msra.mxu0 %v382
        %525 = vmatprep.subr.mxu0 0.0
        %526 = vmatpush1.msra.mxu0 0.0
        %527 = vmatprep.subr.mxu0 0.0
        %528 = vmatpush1.msra.mxu0 0.0
        %529 = vmatprep.subr.mxu0 0.0
        %530 = vmatpush1.msra.mxu0 0.0
        %531 = vmatprep.subr.mxu0 0.0
        %532 = vmatpush1.msra.mxu0 0.0
        %533 = vmatprep.subr.mxu0 0.0
        %534 = vmatpush1.msra.mxu0 0.0
        %535 = vmatprep.subr.mxu0 0.0
        %536 = vmatpush1.msra.mxu0 0.0
        %537 = vmatprep.subr.mxu0 0.0
        %538 = vmatpush1.msra.mxu0 0.0
        %539 = vmatprep.subr.mxu0 0.0
        %540 = vmatpush1.msra.mxu0 0.0
        %541 = vmatprep.subr.mxu0 0.0
        %542 = vmatpush1.msra.mxu0 0.0
        %543 = vmatprep.subr.mxu0 0.0
        %544 = vmatpush1.msra.mxu0 0.0
        %545 = vmatprep.subr.mxu0 0.0
        %546 = vmatpush1.msra.mxu0 0.0
        %547 = vmatprep.subr.mxu0 0.0
        %548 = vmatpush1.msra.mxu0 0.0
        %549 = vmatprep.subr.mxu0 0.0
        %550 = vmatpush1.msra.mxu0 0.0
        %551 = vmatprep.subr.mxu0 0.0
        %552 = vmatpush1.msra.mxu0 0.0
        %553 = vmatprep.subr.mxu0 0.0
        %554 = vmatpush1.msra.mxu0 0.0
        %555 = vmatprep.subr.mxu0 0.0
        %556 = vmatpush1.msra.mxu0 0.0
        %557 = vmatprep.subr.mxu0 0.0
        %558 = vmatpush1.msra.mxu0 0.0
        %559 = vmatprep.subr.mxu0 0.0
        %560 = vmatpush1.msra.mxu0 0.0
        %561 = vmatprep.subr.mxu0 0.0
        %562 = vmatpush1.msra.mxu0 0.0
        %563 = vmatprep.subr.mxu0 0.0
        %564 = vmatpush1.msra.mxu0 0.0
        %565 = vmatprep.subr.mxu0 0.0
        %566 = vmatpush1.msra.mxu0 0.0
        %567 = vmatprep.subr.mxu0 0.0
        %568 = vmatpush1.msra.mxu0 0.0
        %569 = vmatprep.subr.mxu0 0.0
        %570 = vmatpush1.msra.mxu0 0.0
        %571 = vmatprep.subr.mxu0 0.0
        %572 = vmatpush1.msra.mxu0 0.0
        %573 = vmatprep.subr.mxu0 0.0
        %574 = vmatpush1.msra.mxu0 0.0
        %575 = vmatprep.subr.mxu0 0.0
        %576 = vmatpush1.msra.mxu0 0.0
        %577 = vmatprep.subr.mxu0 0.0
        %578 = vmatpush1.msra.mxu0 0.0
        %579 = vmatprep.subr.mxu0 0.0
        %580 = vmatpush1.msra.mxu0 0.0
        %581 = vmatprep.subr.mxu0 0.0
        %582 = vmatpush1.msra.mxu0 0.0
        %583 = vmatprep.subr.mxu0 0.0
        %584 = vmatpush1.msra.mxu0 0.0
        %585 = vmatprep.subr.mxu0 0.0
        %586 = vmatpush1.msra.mxu0 0.0
        %587 = vmatprep.mubr.f32.mxu0 0.0
        %588 = vmatmul.mubr.f32.gmra.mrb[0].mxu0 %v521
        %v589 = vpop.f32.mrb[0].mxu0
        %v590 = vadd.f32 %v518, %v589
        %v591 = vpop.f32.mrb[0].mxu0
        %v592 = vadd.f32 %v518, %v591
        %593 = vdwg.mxu0
        %v594 = vxor.u32 %v590, 2147483648
        %v595 = vxor.u32 %v592, 2147483648
        %v596 = vmul.f32 %v594, 1.442695
        %v597 = vpow.pop %v596
        %v598 = vmul.f32 %v595, 1.442695
        %v599 = vpow.pop %v598
        %v600 = vadd.f32 %v597, 1.0
        %v601 = vadd.f32 %v599, 1.0
        %v602 = vrcp.pop %v600
        %v603 = vmul.f32 1.0, %v602
        %v604 = vrcp.pop %v601
        %v605 = vmul.f32 1.0, %v604
        %v608 = vcombine.low %v603, %v605
        %610 = vst [vmem:[%s282] sm:$0xff] %v608
        %s611 = sand.u32 %s158, 1
        %s612 = scalar_lea.sflag [#allocation3], %s611
        %s613 = sand.u32 %s158, 1
        %s614 = smul.addr %s613, 128
        %s615 = scalar_lea.vmem [#allocation2], %s614
        %s616 = sand.u32 %s186, 1
        %s617 = scalar_lea.sflag [#allocation5], %s616
        %s618 = sand.u32 %s186, 1
        %s619 = smul.addr %s618, 8
        %s620 = scalar_lea.vmem [#allocation4], %s619
        // Predicated region
        $region41: #{tpu_custom_call.1} parent=39 // pred_check
          %p621 = pneg %p168
        $region42: #{tpu_custom_call.1} parent=39 // pred_check_branch
          %623 = sbr.rel (%p621) target = $region44
        $region43: #{tpu_custom_call.1} parent=39 // pred_region
          %s624 = smul.u32 2, %s29
          %s626 = ssub.s32 2048, 2048
          %627 = vsyncadd %s612, %s626
          %s628 = smul.addr %s28, 16
          %s629 = sadd.s32 %s624, %s628
          %s630 = smul.addr %s629, 128
          %s631 = scalar_lea.hbm %s5, %s630
          %s632 = sshll.u32 %s615, 4
          %s633 = int_to_ptr.vmem [resolvable:$true] %s632
          %638 = dma.vmem_to_hbm [thread:$0]  %s633, 2048, %s631, %s612, 256, 256, 16
        $region44: #{tpu_custom_call.1} parent=39 // pred_fallthru
          _
        // Predicated region
        $region45: #{tpu_custom_call.1} parent=39 // pred_check
          %p639 = pneg %p196
        $region46: #{tpu_custom_call.1} parent=39 // pred_check_branch
          %641 = sbr.rel (%p639) target = $region48
        $region47: #{tpu_custom_call.1} parent=39 // pred_region
          %s642 = smul.u32 2, %s29
          %s644 = ssub.s32 128, 128
          %645 = vsyncadd %s617, %s644
          %s646 = smul.addr %s28, 2
          %s647 = sadd.s32 %s642, %s646
          %s648 = smul.addr %s647, 64
          %s649 = scalar_lea.hbm %s6, %s648
          %s651 = sshll.u32 %s620, 4
          %s652 = int_to_ptr.vmem [resolvable:$true] %s651
          %654 = dma.vmem_to_hbm [thread:$0]  %s652, 128, %s649, %s617
        $region48: #{tpu_custom_call.1} parent=39 // pred_fallthru
          _
      $region40: #{tpu_custom_call.1} parent=5 // pred_fallthru
        _
      %p655 = scmp.le.s32.totalorder 2, %s19
      // Predicated region
      $region49: #{tpu_custom_call.1} parent=5 // pred_check
        %p656 = pneg %p655
      $region50: #{tpu_custom_call.1} parent=5 // pred_check_branch
        %658 = sbr.rel (%p656) target = $region52
      $region51: #{tpu_custom_call.1} parent=5 // pred_region
        %s659 = ssub.s32 %s19, 2
        // Predicated region
        $region53: #{tpu_custom_call.1} parent=51 // pred_check
          %p660 = pneg %p174
        $region54: #{tpu_custom_call.1} parent=51 // pred_check_branch
          %662 = sbr.rel (%p660) target = $region56
        $region55: #{tpu_custom_call.1} parent=51 // pred_region
          %s663 = sand.u32 %s159, 1
          %s664 = scalar_lea.sflag [#allocation3], %s663
          %s665 = sand.u32 %s159, 1
          %s666 = smul.addr %s665, 128
          %s667 = scalar_lea.vmem [#allocation2], %s666
          %668 = dma.done %s664, 2048
        $region56: #{tpu_custom_call.1} parent=51 // pred_fallthru
          _
        // Predicated region
        $region57: #{tpu_custom_call.1} parent=51 // pred_check
          %p669 = pneg %p202
        $region58: #{tpu_custom_call.1} parent=51 // pred_check_branch
          %671 = sbr.rel (%p669) target = $region60
        $region59: #{tpu_custom_call.1} parent=51 // pred_region
          %s672 = sand.u32 %s187, 1
          %s673 = scalar_lea.sflag [#allocation5], %s672
          %s674 = sand.u32 %s187, 1
          %s675 = smul.addr %s674, 8
          %s676 = scalar_lea.vmem [#allocation4], %s675
          %677 = dma.done %s673, 128
        $region60: #{tpu_custom_call.1} parent=51 // pred_fallthru
          _
      $region52: #{tpu_custom_call.1} parent=5 // pred_fallthru
        _
    $region6: #{tpu_custom_call.1} parent=1 // loop_footer
      %s23 = sadd.s32 1, %s19
    $region7: #{tpu_custom_call.1} parent=1 // loop_footer_branch
      %18 = sbr.rel target = $region3
    $region8: #{tpu_custom_call.1} parent=1 // loop_exit
      _
    %678 = vsyncpa [#allocation3], 1
    %s679 = scalar_lea.sflag [#allocation3], 1
    %680 = vsyncpa %s679, 1
    %681 = vsyncpa [#allocation5], 1
    %s682 = scalar_lea.sflag [#allocation5], 1
    %683 = vsyncpa %s682, 1

</llo_original>
